<compile_context>
chip_gen: v6e
topology: v6e:2x2x1
jax: 0.10.0
libtpu: 0.0.40
codegen_flags: <defaults>
</compile_context>

<pallas_src>
import functools

import jax
import jax.numpy as jnp
from jax import lax
from jax.experimental import pallas as pl
from jax.experimental.pallas import tpu as pltpu


def _round_up(x, m):
    return ((x + m - 1) // m) * m


def _hi_distance_loss_kernel(xr_ref, xc_ref, rowinfo_ref, colinfo_ref,
                             out_ref, s0_ref, s1_ref, sm_ref, cm_ref,
                             *, margin, b_real, mask_cols):
    f32 = jnp.float32
    TI = xr_ref.shape[0]
    TJ = xc_ref.shape[0]
    j = pl.program_id(1)

    @pl.when(j == 0)
    def _init():
        s0_ref[...] = jnp.zeros_like(s0_ref)
        s1_ref[...] = jnp.zeros_like(s1_ref)
        sm_ref[...] = jnp.zeros_like(sm_ref)
        cm_ref[...] = jnp.zeros_like(cm_ref)

    x_i = xr_ref[...]                       # [TI, Dp]
    x_j = xc_ref[...]                       # [TJ, Dp]
    lab_i = rowinfo_ref[:, 1:2]             # [TI, 1]
    sq_i = rowinfo_ref[:, 2:3]              # [TI, 1]
    bin_j = colinfo_ref[0:1, :]             # [1, TJ]
    lab_j = colinfo_ref[1:2, :]             # [1, TJ]
    sq_j = colinfo_ref[2:3, :]              # [1, TJ]

    # pairwise squared distances for this tile (single MXU matmul)
    xxt = lax.dot_general(x_i, x_j, (((1,), (1,)), ((), ())),
                          preferred_element_type=f32)            # [TI, TJ]
    dist = jnp.maximum(sq_i + sq_j - 2.0 * xxt, f32(1e-10))

    # zero the diagonal (and padded columns) -- equivalent to the reference
    # diag_mask because every mask used with dist has a zero diagonal.
    r = pl.program_id(0) * TI + lax.broadcasted_iota(jnp.int32, (TI, TJ), 0)
    c = j * TJ + lax.broadcasted_iota(jnp.int32, (TI, TJ), 1)
    keep = r != c
    if mask_cols:
        keep = jnp.logical_and(keep, c < b_real)
    dist = jnp.where(keep, dist, f32(0.0))

    same = jnp.logical_and(keep, lab_i == lab_j).astype(f32)     # same family

    s0_ref[...] += jnp.sum(dist, axis=1, keepdims=True)          # sum dist
    s1_ref[...] += jnp.sum(bin_j * dist, axis=1, keepdims=True)  # sum bin_j*d
    sm_ref[...] += jnp.sum(same * dist, axis=1, keepdims=True)   # sum same*d
    cm_ref[...] += jnp.sum(same, axis=1, keepdims=True)          # count same

    @pl.when(j == pl.num_programs(1) - 1)
    def _finalize():
        m = f32(margin)
        one = f32(1.0)
        bin_i = rowinfo_ref[:, 0:1]
        ben_i = 1.0 - bin_i
        cnt_sb = rowinfo_ref[:, 3:4]        # same-benign count (off-diag)
        cnt_bn = rowinfo_ref[:, 4:5]        # different-binary count
        cnt_sbin = rowinfo_ref[:, 5:6]      # same-binary count (off-diag)
        S0 = s0_ref[...]
        S1 = s1_ref[...]
        SM = sm_ref[...]
        CM = cm_ref[...]

        sum_sbin = bin_i * S1 + ben_i * (S0 - S1)   # same-binary dist sum
        sum_sb = ben_i * (S0 - S1)                  # same-benign dist sum
        sum_om = sum_sbin - SM                      # other-malware dist sum
        sum_smf = SM - sum_sb                       # same-mal-family dist sum
        sum_bn = bin_i * (S0 - S1) + ben_i * S1     # different-binary dist sum
        cnt_om = cnt_sbin - CM
        cnt_smf = CM - cnt_sb

        loss = (jnp.maximum(sum_sb - cnt_sb * m, 0.0) / jnp.maximum(cnt_sb, one)
                + jnp.maximum(sum_om - cnt_om * m, 0.0) / jnp.maximum(cnt_om, one)
                + sum_smf / jnp.maximum(cnt_smf, one)
                + jnp.maximum(cnt_bn * (2.0 * m) - sum_bn, 0.0)
                / jnp.maximum(cnt_bn, one))
        out_ref[...] = loss


def hi_distance_loss(features, binary_cat_labels, labels, margin=10.0):
    """Pallas TPU implementation of HiDistanceLoss.forward
    (reduce='mean', sample_reduce='mean', weight=None, split=None)."""
    # TODO(synk): weight=, split=, reduce='none' and sample_reduce='max'
    # branches of the PyTorch module are not implemented.
    B, D = features.shape
    assert labels.shape[0] == B, "Num of labels does not match num of features"
    f32 = jnp.float32

    x = features.astype(f32)
    bin_ = binary_cat_labels[:, 1].astype(f32)       # [B]
    lab = labels.astype(f32)                         # [B]
    ben_ = 1.0 - bin_
    n_mal = jnp.sum(bin_)
    n_ben = f32(B) - n_mal
    sq = jnp.sum(x * x, axis=1)                      # [B] squared norms

    # label-only per-row counts (O(B)); same-family counts accumulate in-kernel
    cnt_sb = ben_ * (n_ben - 1.0)
    cnt_bn = bin_ * n_ben + ben_ * n_mal
    cnt_sbin = bin_ * n_mal + ben_ * n_ben - 1.0

    # --- padding & tile selection -------------------------------------------
    D_pad = _round_up(max(D, 1), 128)
    if B > 256:
        tile_i, tile_j = 256, 512          # fits default scoped VMEM everywhere
        B_pad = _round_up(B, 512)
    else:
        B_pad = _round_up(B, 8)
        tile_i = tile_j = B_pad
    n_i = B_pad // tile_i
    n_j = B_pad // tile_j

    xp = jnp.zeros((B_pad, D_pad), f32).at[:B, :D].set(x)
    rowinfo = jnp.zeros((B_pad, 6), f32).at[:B, :].set(
        jnp.stack([bin_, lab, sq, cnt_sb, cnt_bn, cnt_sbin], axis=1))
    colinfo = jnp.zeros((8, B_pad), f32).at[:3, :B].set(
        jnp.stack([bin_, lab, sq], axis=0))

    kernel = functools.partial(_hi_distance_loss_kernel, margin=float(margin),
                               b_real=B, mask_cols=(B < B_pad))
    per_row = pl.pallas_call(
        kernel,
        out_shape=jax.ShapeDtypeStruct((B_pad, 1), f32),
        grid_spec=pltpu.PrefetchScalarGridSpec(
            num_scalar_prefetch=0,
            grid=(n_i, n_j),
            in_specs=[
                pl.BlockSpec((tile_i, D_pad), lambda i, j: (i, 0)),   # row feats
                pl.BlockSpec((tile_j, D_pad), lambda i, j: (j, 0)),   # col feats
                pl.BlockSpec((tile_i, 6), lambda i, j: (i, 0)),       # row info
                pl.BlockSpec((8, tile_j), lambda i, j: (0, j)),       # col info
            ],
            out_specs=pl.BlockSpec((tile_i, 1), lambda i, j: (i, 0)),
            scratch_shapes=[pltpu.VMEM((tile_i, 1), f32)] * 4,
        ),
        compiler_params=pltpu.CompilerParams(
            dimension_semantics=("parallel", "arbitrary"),
            vmem_limit_bytes=48 * 1024 * 1024),
        cost_estimate=pl.CostEstimate(
            flops=2 * B_pad * B_pad * D_pad + 12 * B_pad * B_pad,
            transcendentals=0,
            bytes_accessed=4 * (B_pad * D_pad * (n_i + 1) + 16 * B_pad)),
    )(xp, xp, rowinfo, colinfo)

    return jnp.sum(per_row[:B, 0]) / f32(B)


def _reference_loss(features, binary_cat_labels, labels, margin=10.0):
    """Pure-JAX reference mirroring the PyTorch forward (for verification)."""
    B = features.shape[0]
    bl = binary_cat_labels[:, 1].astype(jnp.float32).reshape(B, 1)
    lab = labels.astype(jnp.float32).reshape(B, 1)
    binary_mask = (bl == bl.T).astype(jnp.float32)
    multi_mask = (lab == lab.T).astype(jnp.float32)
    other_mal_mask = binary_mask - multi_mask
    ben = 1.0 - bl
    same_ben_mask = ben @ ben.T
    same_mal_fam_mask = multi_mask - same_ben_mask
    binary_negate_mask = 1.0 - binary_mask
    diag_mask = 1.0 - jnp.eye(B, dtype=jnp.float32)
    other_mal_mask *= diag_mask
    same_ben_mask *= diag_mask
    same_mal_fam_mask *= diag_mask
    x = features.astype(jnp.float32)
    sq = jnp.sum(x * x, axis=1, keepdims=True)
    dist = jnp.maximum(sq + sq.T - 2.0 * (x @ x.T), 1e-10)
    m = jnp.float32(margin)
    cnt_sb = same_ben_mask.sum(1)
    cnt_om = other_mal_mask.sum(1)
    cnt_smf = same_mal_fam_mask.sum(1)
    cnt_bn = binary_negate_mask.sum(1)
    sum_sb = jnp.maximum((same_ben_mask * dist).sum(1) - cnt_sb * m, 0.0)
    sum_om = jnp.maximum((other_mal_mask * dist).sum(1) - cnt_om * m, 0.0)
    sum_smf = (same_mal_fam_mask * dist).sum(1)
    sum_bn = jnp.maximum(cnt_bn * 2.0 * m - (binary_negate_mask * dist).sum(1), 0.0)
    loss = (sum_sb / jnp.maximum(cnt_sb, 1.0)
            + sum_om / jnp.maximum(cnt_om, 1.0)
            + sum_smf / jnp.maximum(cnt_smf, 1.0)
            + sum_bn / jnp.maximum(cnt_bn, 1.0))
    return loss.mean()


if __name__ == "__main__":
    key = jax.random.PRNGKey(0)

    def make_inputs(k, B, D, n_classes):
        kf, kl = jax.random.split(k)
        feats = jax.random.normal(kf, (B, D), dtype=jnp.float32)
        labels = jax.random.randint(kl, (B,), 0, n_classes, dtype=jnp.int32)  # 0 = benign
        binary = (labels > 0).astype(jnp.int32)
        bin_cat = jax.nn.one_hot(binary, 2, dtype=jnp.float32)
        return feats, bin_cat, labels

    k1, k2 = jax.random.split(key)

    # case 1: tiny batch, single tile (exercises D padding 32 -> 128)
    feats, bin_cat, labels = make_inputs(k1, 16, 32, 4)
    loss = jax.block_until_ready(hi_distance_loss(feats, bin_cat, labels, margin=10.0))
    ref = _reference_loss(feats, bin_cat, labels, margin=10.0)
    assert jnp.allclose(loss, ref, rtol=1e-5, atol=1e-5), (loss, ref)

    # case 2: multi-tile grid with batch padding (B=600 -> 1024, grid 4x2)
    feats2, bin_cat2, labels2 = make_inputs(k2, 600, 48, 7)
    loss2 = jax.block_until_ready(hi_distance_loss(feats2, bin_cat2, labels2, margin=5.0))
    ref2 = _reference_loss(feats2, bin_cat2, labels2, margin=5.0)
    assert jnp.allclose(loss2, ref2, rtol=1e-4, atol=1e-4), (loss2, ref2)

    print("KERNEL_OK")
</pallas_src>

<mosaic_0001>
module attributes {stable_mosaic.version = 11 : i64} {
  func.func @_hi_distance_loss_kernel(%arg0: i32, %arg1: i32, %arg2: memref<16x128xf32, #tpu.memory_space<vmem>>, %arg3: memref<16x128xf32, #tpu.memory_space<vmem>>, %arg4: memref<16x6xf32, #tpu.memory_space<vmem>>, %arg5: memref<8x16xf32, #tpu.memory_space<vmem>>, %arg6: memref<16x1xf32, #tpu.memory_space<vmem>>, %arg7: memref<16x1xf32, #tpu.memory_space<vmem>>, %arg8: memref<16x1xf32, #tpu.memory_space<vmem>>, %arg9: memref<16x1xf32, #tpu.memory_space<vmem>>, %arg10: memref<16x1xf32, #tpu.memory_space<vmem>>) attributes {dimension_semantics = [#tpu.dimension_semantics<parallel>, #tpu.dimension_semantics<arbitrary>], iteration_bounds = array<i64: 1, 1>, scalar_prefetch = 0 : i64, scratch_operands = 4 : i64, tpu.core_type = #tpu.core_type<tc>, window_params = [{transform_indices = @transform_0, window_bounds = array<i64: 16, 128>}, {transform_indices = @transform_1, window_bounds = array<i64: 16, 128>}, {transform_indices = @transform_2, window_bounds = array<i64: 16, 6>}, {transform_indices = @transform_3, window_bounds = array<i64: 8, 16>}, {transform_indices = @transform_4, window_bounds = array<i64: 16, 1>}]} {
    %c0_i32 = arith.constant 0 : i32
    %0 = arith.cmpi eq, %arg1, %c0_i32 : i32
    %1 = arith.extui %0 : i1 to i32
    %c0_i32_0 = arith.constant 0 : i32
    %2 = arith.cmpi ne, %1, %c0_i32_0 : i32
    scf.if %2 {
      %cst_38 = arith.constant 0.000000e+00 : f32
      %62 = vector.broadcast %cst_38 : f32 to vector<16x1xf32>
      %c0_39 = arith.constant 0 : index
      %c0_40 = arith.constant 0 : index
      %63 = vector.load %arg7[%c0_39, %c0_40] : memref<16x1xf32, #tpu.memory_space<vmem>>, vector<16x1xf32>
      tpu.vector_store %arg7[%c0_39, %c0_40], %62 {strides = array<i32>} : memref<16x1xf32, #tpu.memory_space<vmem>>, vector<16x1xf32>,
      %cst_41 = arith.constant 0.000000e+00 : f32
      %64 = vector.broadcast %cst_41 : f32 to vector<16x1xf32>
      %c0_42 = arith.constant 0 : index
      %c0_43 = arith.constant 0 : index
      %65 = vector.load %arg8[%c0_42, %c0_43] : memref<16x1xf32, #tpu.memory_space<vmem>>, vector<16x1xf32>
      tpu.vector_store %arg8[%c0_42, %c0_43], %64 {strides = array<i32>} : memref<16x1xf32, #tpu.memory_space<vmem>>, vector<16x1xf32>,
      %cst_44 = arith.constant 0.000000e+00 : f32
      %66 = vector.broadcast %cst_44 : f32 to vector<16x1xf32>
      %c0_45 = arith.constant 0 : index
      %c0_46 = arith.constant 0 : index
      %67 = vector.load %arg9[%c0_45, %c0_46] : memref<16x1xf32, #tpu.memory_space<vmem>>, vector<16x1xf32>
      tpu.vector_store %arg9[%c0_45, %c0_46], %66 {strides = array<i32>} : memref<16x1xf32, #tpu.memory_space<vmem>>, vector<16x1xf32>,
      %cst_47 = arith.constant 0.000000e+00 : f32
      %68 = vector.broadcast %cst_47 : f32 to vector<16x1xf32>
      %c0_48 = arith.constant 0 : index
      %c0_49 = arith.constant 0 : index
      %69 = vector.load %arg10[%c0_48, %c0_49] : memref<16x1xf32, #tpu.memory_space<vmem>>, vector<16x1xf32>
      tpu.vector_store %arg10[%c0_48, %c0_49], %68 {strides = array<i32>} : memref<16x1xf32, #tpu.memory_space<vmem>>, vector<16x1xf32>,
    } else {
    }
    %c0 = arith.constant 0 : index
    %c0_1 = arith.constant 0 : index
    %3 = vector.load %arg2[%c0, %c0_1] : memref<16x128xf32, #tpu.memory_space<vmem>>, vector<16x128xf32>
    %c0_2 = arith.constant 0 : index
    %c0_3 = arith.constant 0 : index
    %4 = vector.load %arg3[%c0_2, %c0_3] : memref<16x128xf32, #tpu.memory_space<vmem>>, vector<16x128xf32>
    %c0_4 = arith.constant 0 : index
    %c1 = arith.constant 1 : index
    %5 = vector.load %arg4[%c0_4, %c1] : memref<16x6xf32, #tpu.memory_space<vmem>>, vector<16x1xf32>
    %c0_5 = arith.constant 0 : index
    %c2 = arith.constant 2 : index
    %6 = vector.load %arg4[%c0_5, %c2] : memref<16x6xf32, #tpu.memory_space<vmem>>, vector<16x1xf32>
    %c0_6 = arith.constant 0 : index
    %c0_7 = arith.constant 0 : index
    %7 = vector.load %arg5[%c0_6, %c0_7] : memref<8x16xf32, #tpu.memory_space<vmem>>, vector<1x16xf32>
    %c1_8 = arith.constant 1 : index
    %c0_9 = arith.constant 0 : index
    %8 = vector.load %arg5[%c1_8, %c0_9] : memref<8x16xf32, #tpu.memory_space<vmem>>, vector<1x16xf32>
    %c2_10 = arith.constant 2 : index
    %c0_11 = arith.constant 0 : index
    %9 = vector.load %arg5[%c2_10, %c0_11] : memref<8x16xf32, #tpu.memory_space<vmem>>, vector<1x16xf32>
    %cst = arith.constant dense<0.000000e+00> : vector<16x16xf32>
    %10 = tpu.matmul %3, %4, %cst {dimension_numbers = #tpu.dot_dimension_numbers<[1], [1], [0], [0], [0, 0, 1, 0], [], []>} : vector<16x128xf32>, vector<16x128xf32>, vector<16x16xf32> -> vector<16x16xf32>
    %11 = vector.broadcast %6 : vector<16x1xf32> to vector<16x16xf32>
    %12 = vector.broadcast %9 : vector<1x16xf32> to vector<16x16xf32>
    %13 = arith.addf %11, %12 : vector<16x16xf32>
    %cst_12 = arith.constant 2.000000e+00 : f32
    %14 = vector.broadcast %cst_12 : f32 to vector<16x16xf32>
    %15 = arith.mulf %14, %10 : vector<16x16xf32>
    %16 = arith.subf %13, %15 : vector<16x16xf32>
    %cst_13 = arith.constant 1.000000e-10 : f32
    %17 = vector.broadcast %cst_13 : f32 to vector<16x16xf32>
    %18 = arith.maximumf %16, %17 : vector<16x16xf32>
    %c16_i32 = arith.constant 16 : i32
    %19 = arith.muli %arg0, %c16_i32 : i32
    %20 = tpu.iota {dimensions = array<i32: 0>} : vector<16x16xi32>
    %21 = vector.broadcast %19 : i32 to vector<16x16xi32>
    %22 = arith.addi %21, %20 : vector<16x16xi32>
    %c16_i32_14 = arith.constant 16 : i32
    %23 = arith.muli %arg1, %c16_i32_14 : i32
    %24 = tpu.iota {dimensions = array<i32: 1>} : vector<16x16xi32>
    %25 = vector.broadcast %23 : i32 to vector<16x16xi32>
    %26 = arith.addi %25, %24 : vector<16x16xi32>
    %27 = arith.cmpi ne, %22, %26 : vector<16x16xi32>
    %cst_15 = arith.constant 0.000000e+00 : f32
    %28 = vector.broadcast %cst_15 : f32 to vector<16x16xf32>
    %29 = arith.select %27, %18, %28 : vector<16x16xi1>, vector<16x16xf32>
    %30 = vector.broadcast %5 : vector<16x1xf32> to vector<16x16xf32>
    %31 = vector.broadcast %8 : vector<1x16xf32> to vector<16x16xf32>
    %32 = arith.cmpf oeq, %30, %31 : vector<16x16xf32>
    %33 = arith.andi %27, %32 : vector<16x16xi1>
    %34 = arith.extui %33 : vector<16x16xi1> to vector<16x16xi32>
    %35 = arith.sitofp %34 : vector<16x16xi32> to vector<16x16xf32>
    %c0_16 = arith.constant 0 : index
    %c0_17 = arith.constant 0 : index
    %36 = vector.load %arg7[%c0_16, %c0_17] : memref<16x1xf32, #tpu.memory_space<vmem>>, vector<16x1xf32>
    %cst_18 = arith.constant dense<0.000000e+00> : vector<16xf32>
    %37 = vector.multi_reduction <add>, %29, %cst_18 [1] : vector<16x16xf32> to vector<16xf32>
    %38 = vector.shape_cast %37 : vector<16xf32> to vector<16x1xf32>
    %39 = arith.addf %36, %38 : vector<16x1xf32>
    %c0_19 = arith.constant 0 : index
    %c0_20 = arith.constant 0 : index
    %40 = vector.load %arg7[%c0_19, %c0_20] : memref<16x1xf32, #tpu.memory_space<vmem>>, vector<16x1xf32>
    tpu.vector_store %arg7[%c0_19, %c0_20], %39 {strides = array<i32>} : memref<16x1xf32, #tpu.memory_space<vmem>>, vector<16x1xf32>,
    %c0_21 = arith.constant 0 : index
    %c0_22 = arith.constant 0 : index
    %41 = vector.load %arg8[%c0_21, %c0_22] : memref<16x1xf32, #tpu.memory_space<vmem>>, vector<16x1xf32>
    %42 = vector.broadcast %7 : vector<1x16xf32> to vector<16x16xf32>
    %43 = arith.mulf %42, %29 : vector<16x16xf32>
    %cst_23 = arith.constant dense<0.000000e+00> : vector<16xf32>
    %44 = vector.multi_reduction <add>, %43, %cst_23 [1] : vector<16x16xf32> to vector<16xf32>
    %45 = vector.shape_cast %44 : vector<16xf32> to vector<16x1xf32>
    %46 = arith.addf %41, %45 : vector<16x1xf32>
    %c0_24 = arith.constant 0 : index
    %c0_25 = arith.constant 0 : index
    %47 = vector.load %arg8[%c0_24, %c0_25] : memref<16x1xf32, #tpu.memory_space<vmem>>, vector<16x1xf32>
    tpu.vector_store %arg8[%c0_24, %c0_25], %46 {strides = array<i32>} : memref<16x1xf32, #tpu.memory_space<vmem>>, vector<16x1xf32>,
    %c0_26 = arith.constant 0 : index
    %c0_27 = arith.constant 0 : index
    %48 = vector.load %arg9[%c0_26, %c0_27] : memref<16x1xf32, #tpu.memory_space<vmem>>, vector<16x1xf32>
    %49 = arith.mulf %35, %29 : vector<16x16xf32>
    %cst_28 = arith.constant dense<0.000000e+00> : vector<16xf32>
    %50 = vector.multi_reduction <add>, %49, %cst_28 [1] : vector<16x16xf32> to vector<16xf32>
    %51 = vector.shape_cast %50 : vector<16xf32> to vector<16x1xf32>
    %52 = arith.addf %48, %51 : vector<16x1xf32>
    %c0_29 = arith.constant 0 : index
    %c0_30 = arith.constant 0 : index
    %53 = vector.load %arg9[%c0_29, %c0_30] : memref<16x1xf32, #tpu.memory_space<vmem>>, vector<16x1xf32>
    tpu.vector_store %arg9[%c0_29, %c0_30], %52 {strides = array<i32>} : memref<16x1xf32, #tpu.memory_space<vmem>>, vector<16x1xf32>,
    %c0_31 = arith.constant 0 : index
    %c0_32 = arith.constant 0 : index
    %54 = vector.load %arg10[%c0_31, %c0_32] : memref<16x1xf32, #tpu.memory_space<vmem>>, vector<16x1xf32>
    %cst_33 = arith.constant dense<0.000000e+00> : vector<16xf32>
    %55 = vector.multi_reduction <add>, %35, %cst_33 [1] : vector<16x16xf32> to vector<16xf32>
    %56 = vector.shape_cast %55 : vector<16xf32> to vector<16x1xf32>
    %57 = arith.addf %54, %56 : vector<16x1xf32>
    %c0_34 = arith.constant 0 : index
    %c0_35 = arith.constant 0 : index
    %58 = vector.load %arg10[%c0_34, %c0_35] : memref<16x1xf32, #tpu.memory_space<vmem>>, vector<16x1xf32>
    tpu.vector_store %arg10[%c0_34, %c0_35], %57 {strides = array<i32>} : memref<16x1xf32, #tpu.memory_space<vmem>>, vector<16x1xf32>,
    %c0_i32_36 = arith.constant 0 : i32
    %59 = arith.cmpi eq, %arg1, %c0_i32_36 : i32
    %60 = arith.extui %59 : i1 to i32
    %c0_i32_37 = arith.constant 0 : i32
    %61 = arith.cmpi ne, %60, %c0_i32_37 : i32
    scf.if %61 {
      %c0_38 = arith.constant 0 : index
      %c0_39 = arith.constant 0 : index
      %62 = vector.load %arg4[%c0_38, %c0_39] : memref<16x6xf32, #tpu.memory_space<vmem>>, vector<16x1xf32>
      %cst_40 = arith.constant 1.000000e+00 : f32
      %63 = vector.broadcast %cst_40 : f32 to vector<16x1xf32>
      %64 = arith.subf %63, %62 : vector<16x1xf32>
      %c0_41 = arith.constant 0 : index
      %c3 = arith.constant 3 : index
      %65 = vector.load %arg4[%c0_41, %c3] : memref<16x6xf32, #tpu.memory_space<vmem>>, vector<16x1xf32>
      %c0_42 = arith.constant 0 : index
      %c4 = arith.constant 4 : index
      %66 = vector.load %arg4[%c0_42, %c4] : memref<16x6xf32, #tpu.memory_space<vmem>>, vector<16x1xf32>
      %c0_43 = arith.constant 0 : index
      %c5 = arith.constant 5 : index
      %67 = vector.load %arg4[%c0_43, %c5] : memref<16x6xf32, #tpu.memory_space<vmem>>, vector<16x1xf32>
      %c0_44 = arith.constant 0 : index
      %c0_45 = arith.constant 0 : index
      %68 = vector.load %arg7[%c0_44, %c0_45] : memref<16x1xf32, #tpu.memory_space<vmem>>, vector<16x1xf32>
      %c0_46 = arith.constant 0 : index
      %c0_47 = arith.constant 0 : index
      %69 = vector.load %arg8[%c0_46, %c0_47] : memref<16x1xf32, #tpu.memory_space<vmem>>, vector<16x1xf32>
      %c0_48 = arith.constant 0 : index
      %c0_49 = arith.constant 0 : index
      %70 = vector.load %arg9[%c0_48, %c0_49] : memref<16x1xf32, #tpu.memory_space<vmem>>, vector<16x1xf32>
      %c0_50 = arith.constant 0 : index
      %c0_51 = arith.constant 0 : index
      %71 = vector.load %arg10[%c0_50, %c0_51] : memref<16x1xf32, #tpu.memory_space<vmem>>, vector<16x1xf32>
      %72 = arith.mulf %62, %69 : vector<16x1xf32>
      %73 = arith.subf %68, %69 : vector<16x1xf32>
      %74 = arith.mulf %64, %73 : vector<16x1xf32>
      %75 = arith.addf %72, %74 : vector<16x1xf32>
      %76 = arith.subf %68, %69 : vector<16x1xf32>
      %77 = arith.mulf %64, %76 : vector<16x1xf32>
      %78 = arith.subf %75, %70 : vector<16x1xf32>
      %79 = arith.subf %70, %77 : vector<16x1xf32>
      %80 = arith.subf %68, %69 : vector<16x1xf32>
      %81 = arith.mulf %62, %80 : vector<16x1xf32>
      %82 = arith.mulf %64, %69 : vector<16x1xf32>
      %83 = arith.addf %81, %82 : vector<16x1xf32>
      %84 = arith.subf %67, %71 : vector<16x1xf32>
      %85 = arith.subf %71, %65 : vector<16x1xf32>
      %cst_52 = arith.constant 1.000000e+01 : f32
      %86 = vector.broadcast %cst_52 : f32 to vector<16x1xf32>
      %87 = arith.mulf %65, %86 : vector<16x1xf32>
      %88 = arith.subf %77, %87 : vector<16x1xf32>
      %cst_53 = arith.constant 0.000000e+00 : f32
      %89 = vector.broadcast %cst_53 : f32 to vector<16x1xf32>
      %90 = arith.maximumf %88, %89 : vector<16x1xf32>
      %cst_54 = arith.constant 1.000000e+00 : f32
      %91 = vector.broadcast %cst_54 : f32 to vector<16x1xf32>
      %92 = arith.maximumf %65, %91 : vector<16x1xf32>
      %93 = arith.divf %90, %92 : vector<16x1xf32>
      %cst_55 = arith.constant 1.000000e+01 : f32
      %94 = vector.broadcast %cst_55 : f32 to vector<16x1xf32>
      %95 = arith.mulf %84, %94 : vector<16x1xf32>
      %96 = arith.subf %78, %95 : vector<16x1xf32>
      %cst_56 = arith.constant 0.000000e+00 : f32
      %97 = vector.broadcast %cst_56 : f32 to vector<16x1xf32>
      %98 = arith.maximumf %96, %97 : vector<16x1xf32>
      %cst_57 = arith.constant 1.000000e+00 : f32
      %99 = vector.broadcast %cst_57 : f32 to vector<16x1xf32>
      %100 = arith.maximumf %84, %99 : vector<16x1xf32>
      %101 = arith.divf %98, %100 : vector<16x1xf32>
      %102 = arith.addf %93, %101 : vector<16x1xf32>
      %cst_58 = arith.constant 1.000000e+00 : f32
      %103 = vector.broadcast %cst_58 : f32 to vector<16x1xf32>
      %104 = arith.maximumf %85, %103 : vector<16x1xf32>
      %105 = arith.divf %79, %104 : vector<16x1xf32>
      %106 = arith.addf %102, %105 : vector<16x1xf32>
      %cst_59 = arith.constant 2.000000e+00 : f32
      %cst_60 = arith.constant 1.000000e+01 : f32
      %107 = arith.mulf %cst_59, %cst_60 : f32
      %108 = vector.broadcast %107 : f32 to vector<16x1xf32>
      %109 = arith.mulf %66, %108 : vector<16x1xf32>
      %110 = arith.subf %109, %83 : vector<16x1xf32>
      %cst_61 = arith.constant 0.000000e+00 : f32
      %111 = vector.broadcast %cst_61 : f32 to vector<16x1xf32>
      %112 = arith.maximumf %110, %111 : vector<16x1xf32>
      %cst_62 = arith.constant 1.000000e+00 : f32
      %113 = vector.broadcast %cst_62 : f32 to vector<16x1xf32>
      %114 = arith.maximumf %66, %113 : vector<16x1xf32>
      %115 = arith.divf %112, %114 : vector<16x1xf32>
      %116 = arith.addf %106, %115 : vector<16x1xf32>
      %c0_63 = arith.constant 0 : index
      %c0_64 = arith.constant 0 : index
      %117 = vector.load %arg6[%c0_63, %c0_64] : memref<16x1xf32, #tpu.memory_space<vmem>>, vector<16x1xf32>
      tpu.vector_store %arg6[%c0_63, %c0_64], %116 {strides = array<i32>} : memref<16x1xf32, #tpu.memory_space<vmem>>, vector<16x1xf32>,
    } else {
    }
    return
  }
  func.func @transform_0(%arg0: i32, %arg1: i32) -> (i32, i32) {
    %c0_i32 = arith.constant 0 : i32
    %c0_i32_0 = arith.constant 0 : i32
    return %arg0, %c0_i32 : i32, i32
  }
  func.func @transform_1(%arg0: i32, %arg1: i32) -> (i32, i32) {
    %c0_i32 = arith.constant 0 : i32
    %c0_i32_0 = arith.constant 0 : i32
    return %arg1, %c0_i32 : i32, i32
  }
  func.func @transform_2(%arg0: i32, %arg1: i32) -> (i32, i32) {
    %c0_i32 = arith.constant 0 : i32
    %c0_i32_0 = arith.constant 0 : i32
    return %arg0, %c0_i32 : i32, i32
  }
  func.func @transform_3(%arg0: i32, %arg1: i32) -> (i32, i32) {
    %c0_i32 = arith.constant 0 : i32
    %c0_i32_0 = arith.constant 0 : i32
    return %c0_i32, %arg1 : i32, i32
  }
  func.func @transform_4(%arg0: i32, %arg1: i32) -> (i32, i32) {
    %c0_i32 = arith.constant 0 : i32
    %c0_i32_0 = arith.constant 0 : i32
    return %arg0, %c0_i32 : i32, i32
  }
}

</mosaic_0001>

<llo_original>
// kernel: tpu_custom_call.1
$region0: #{tpu_custom_call.1}
  #allocation0 [shape = 'u32[]', space=smem, size = 0x4, offset = 0x4, fixed_abs, tag = 'smem constant byte address 0x4 - core index']
  #allocation1 [shape = 'u32[144,128]{1,0:T(1,128)}', space=vmem, size = 0x12000, scoped, tag = 'internal scratch']
  #allocation2 [shape = 'f32[16,1]{1,0:T(8,128)}', space=vmem, size = 0x2000, scoped, tag = 'scratch operand']
  #allocation3 [shape = 'f32[16,1]{1,0:T(8,128)}', space=vmem, size = 0x2000, scoped, tag = 'scratch operand']
  #allocation4 [shape = 'f32[16,1]{1,0:T(8,128)}', space=vmem, size = 0x2000, scoped, tag = 'scratch operand']
  #allocation5 [shape = 'f32[16,1]{1,0:T(8,128)}', space=vmem, size = 0x2000, scoped, tag = 'scratch operand']
  %s0 = inlined_call_operand.vmem [shape: f32[16,128], index: 0, kind: input, shape index: {}]
  %s1 = inlined_call_operand.hbm [shape: f32[16,128], index: 1, kind: input, shape index: {}]
  %s2 = inlined_call_operand.vmem [shape: f32[16,6], index: 2, kind: input, shape index: {}]
  %s3 = inlined_call_operand.vmem [shape: f32[8,16], index: 3, kind: input, shape index: {}]
  %s4 = inlined_call_operand.vmem [shape: f32[16,1], index: 4, kind: output, shape index: {}]
  %s5 = sld [smem:[#allocation0]]
  $region38: #{tpu_custom_call.1} parent=0
    _
  %s7 = ssub.s32 1, %s5
  %s8 = scalar_select 0, %s7, %s5
  $region1: #{tpu_custom_call.1} parent=0
    #allocation6 [shape = 'u8[8192]{0}', space=vmem, size = 0x2000, scoped, tag = 'input window, operand 1, single buffered']
    #allocation7 [shape = 's32[1]{0}', space=sflag, size = 0x4, scoped, tag = 'scoped memory for tpu_custom_call.1']
    %9 = vsyncpa [#allocation7], 0
    // Predicated region
    $region2: #{tpu_custom_call.1} parent=1 // pred_check
      _
    $region3: #{tpu_custom_call.1} parent=1 // pred_check_branch
      %11 = sbr.rel (0) target = $region5
    $region4: #{tpu_custom_call.1} parent=1 // pred_region
      _
    $region5: #{tpu_custom_call.1} parent=1 // pred_fallthru
      _
    // Predicated region
    $region6: #{tpu_custom_call.1} parent=1 // pred_check
      _
    $region7: #{tpu_custom_call.1} parent=1 // pred_check_branch
      %13 = sbr.rel (0) target = $region9
    $region8: #{tpu_custom_call.1} parent=1 // pred_region
      %s15 = ssub.s32 256, 256
      %16 = vsyncadd [#allocation7], %s15
      %s17 = sshll.u32 [#allocation6], 4
      %s18 = int_to_ptr.vmem [resolvable:$true] %s17
      %23 = dma.hbm_to_vmem [thread:$0]  %s1, 256, %s18, [#allocation7], 128, 128, 8
    $region9: #{tpu_custom_call.1} parent=1 // pred_fallthru
      _
    // Predicated region
    $region10: #{tpu_custom_call.1} parent=1 // pred_check
      _
    $region11: #{tpu_custom_call.1} parent=1 // pred_check_branch
      %25 = sbr.rel (0) target = $region13
    $region12: #{tpu_custom_call.1} parent=1 // pred_region
      _
    $region13: #{tpu_custom_call.1} parent=1 // pred_fallthru
      _
    // Predicated region
    $region14: #{tpu_custom_call.1} parent=1 // pred_check
      _
    $region15: #{tpu_custom_call.1} parent=1 // pred_check_branch
      %27 = sbr.rel (0) target = $region17
    $region16: #{tpu_custom_call.1} parent=1 // pred_region
      _
    $region17: #{tpu_custom_call.1} parent=1 // pred_fallthru
      _
    // Predicated region
    $region18: #{tpu_custom_call.1} parent=1 // pred_check
      _
    $region19: #{tpu_custom_call.1} parent=1 // pred_check_branch
      %29 = sbr.rel (0) target = $region21
    $region20: #{tpu_custom_call.1} parent=1 // pred_region
      %30 = dma.done [#allocation7], 256
    $region21: #{tpu_custom_call.1} parent=1 // pred_fallthru
      _
    %p31 = scmp.eq.s32.totalorder 0, 0
    // Predicated region
    $region22: #{tpu_custom_call.1} parent=1 // pred_check
      %p32 = pneg %p31
    $region23: #{tpu_custom_call.1} parent=1 // pred_check_branch
      %34 = sbr.rel (%p32) target = $region25
    $region24: #{tpu_custom_call.1} parent=1 // pred_region
      %vm35 = vcmask 7168
      %36 = vst.msk [vmem:[#allocation2] sm:$0xff] %vm35, 0.0
      %37 = vst.msk [vmem:[#allocation2 + $0x8] sm:$0xff] %vm35, 0.0
      %38 = vst.msk [vmem:[#allocation3] sm:$0xff] %vm35, 0.0
      %39 = vst.msk [vmem:[#allocation3 + $0x8] sm:$0xff] %vm35, 0.0
      %40 = vst.msk [vmem:[#allocation4] sm:$0xff] %vm35, 0.0
      %41 = vst.msk [vmem:[#allocation4 + $0x8] sm:$0xff] %vm35, 0.0
      %42 = vst.msk [vmem:[#allocation5] sm:$0xff] %vm35, 0.0
      %43 = vst.msk [vmem:[#allocation5 + $0x8] sm:$0xff] %vm35, 0.0
    $region25: #{tpu_custom_call.1} parent=1 // pred_fallthru
      _
    %v44 = vld [vmem:[%s0] sm:$0xff]
    %v45 = vld [vmem:[%s0 + $0x8] sm:$0xff]
    %v46 = vld [vmem:[#allocation6] sm:$0xff]
    %v47 = vld [vmem:[#allocation6 + $0x8] sm:$0xff]
    %v48 = vld [vmem:[%s2] sm:$0xff]
    %v49 = vld [vmem:[%s2 + $0x8] sm:$0xff]
    %v50 = vld [vmem:[%s3] sm:$0x1]
    %v51 = vld [vmem:[%s3 + $0x1] sm:$0x1]
    %v52 = vld [vmem:[%s3 + $0x2] sm:$0x1]
    %53 = vmatprep.subr.mxu0 0.0
    %54 = vmatpush1.xpose.msra.mxu0 0.0
    %55 = vmatprep.subr.mxu0 0.0
    %56 = vmatpush1.xpose.msra.mxu0 0.0
    %57 = vmatprep.subr.mxu0 0.0
    %58 = vmatpush1.xpose.msra.mxu0 0.0
    %59 = vmatprep.subr.mxu0 0.0
    %60 = vmatpush1.xpose.msra.mxu0 0.0
    %61 = vmatprep.subr.mxu0 0.0
    %62 = vmatpush1.xpose.msra.mxu0 0.0
    %63 = vmatprep.subr.mxu0 0.0
    %64 = vmatpush1.xpose.msra.mxu0 0.0
    %65 = vmatprep.subr.mxu0 0.0
    %66 = vmatpush1.xpose.msra.mxu0 0.0
    %67 = vmatprep.subr.mxu0 0.0
    %68 = vmatpush1.xpose.msra.mxu0 0.0
    %69 = vmatprep.subr.mxu0 0.0
    %70 = vmatpush1.xpose.msra.mxu0 0.0
    %71 = vmatprep.subr.mxu0 0.0
    %72 = vmatpush1.xpose.msra.mxu0 0.0
    %73 = vmatprep.subr.mxu0 0.0
    %74 = vmatpush1.xpose.msra.mxu0 0.0
    %75 = vmatprep.subr.mxu0 0.0
    %76 = vmatpush1.xpose.msra.mxu0 0.0
    %77 = vmatprep.subr.mxu0 0.0
    %78 = vmatpush1.xpose.msra.mxu0 0.0
    %79 = vmatprep.subr.mxu0 0.0
    %80 = vmatpush1.xpose.msra.mxu0 0.0
    %81 = vmatprep.subr.mxu0 0.0
    %82 = vmatpush1.xpose.msra.mxu0 %v47
    %83 = vmatprep.subr.mxu0 0.0
    %84 = vmatpush1.xpose.msra.mxu0 %v46
    %85 = vmatprep.subr.mxu0 0.0
    %86 = vmatpush2.xpose.msra.mxu0 0.0
    %87 = vmatprep.subr.mxu0 0.0
    %88 = vmatpush2.xpose.msra.mxu0 0.0
    %89 = vmatprep.subr.mxu0 0.0
    %90 = vmatpush2.xpose.msra.mxu0 0.0
    %91 = vmatprep.subr.mxu0 0.0
    %92 = vmatpush2.xpose.msra.mxu0 0.0
    %93 = vmatprep.subr.mxu0 0.0
    %94 = vmatpush2.xpose.msra.mxu0 0.0
    %95 = vmatprep.subr.mxu0 0.0
    %96 = vmatpush2.xpose.msra.mxu0 0.0
    %97 = vmatprep.subr.mxu0 0.0
    %98 = vmatpush2.xpose.msra.mxu0 0.0
    %99 = vmatprep.subr.mxu0 0.0
    %100 = vmatpush2.xpose.msra.mxu0 0.0
    %101 = vmatprep.subr.mxu0 0.0
    %102 = vmatpush2.xpose.msra.mxu0 0.0
    %103 = vmatprep.subr.mxu0 0.0
    %104 = vmatpush2.xpose.msra.mxu0 0.0
    %105 = vmatprep.subr.mxu0 0.0
    %106 = vmatpush2.xpose.msra.mxu0 0.0
    %107 = vmatprep.subr.mxu0 0.0
    %108 = vmatpush2.xpose.msra.mxu0 0.0
    %109 = vmatprep.subr.mxu0 0.0
    %110 = vmatpush2.xpose.msra.mxu0 0.0
    %111 = vmatprep.subr.mxu0 0.0
    %112 = vmatpush2.xpose.msra.mxu0 0.0
    %113 = vmatprep.subr.mxu0 0.0
    %114 = vmatpush2.xpose.msra.mxu0 0.0
    %115 = vmatprep.subr.mxu0 0.0
    %116 = vmatpush2.xpose.msra.mxu0 0.0
    %117 = vmatprep.mubr.f32.mxu0 0.0
    %118 = vmatmul.mubr.f32.gmra.mxu0 %v44
    %v119 = vpop.f32.mrf.mxu0
    %v120 = vadd.f32 0.0, %v119
    %v121 = vpop.f32.mrf.mxu0
    %122 = vmatprep.mubr.f32.mxu0 0.0
    %123 = vmatmul.mubr.f32.gmra.mxu0 %v45
    %v124 = vpop.f32.mrf.mxu0
    %v125 = vadd.f32 0.0, %v124
    %v126 = vpop.f32.mrf.mxu0
    %127 = vdwg.mxu0
    %129 = vset.pattern.permute.xlu0 2
    %130 = vperm.xlu0 %129, %v48
    %v131 = vpop.permute.xlu0 %130
    %134 = vset.pattern.permute.xlu0 2
    %135 = vperm.xlu0 %134, %v49
    %v136 = vpop.permute.xlu0 %135
    %v138 = vlaneseq
    %v139 = vshrl.u32 %v138, 7
    %v140 = vsub.s32 0, %v139
    %v141 = vrot.slane %v52, %v140
    %v142 = vadd.f32 %v131, %v141
    %v143 = vadd.f32 %v136, %v141
    %v144 = vmul.f32 %v120, 2.0
    %v145 = vmul.f32 %v125, 2.0
    %v146 = vsub.f32 %v142, %v144
    %v147 = vsub.f32 %v143, %v145
    %v148 = vmax.f32 %v146, 1e-10
    %v149 = vmax.f32 %v147, 1e-10
    %s150 = smul.u32 0, 16
    %v151 = vlaneseq
    %v152 = vshrl.u32 %v151, 7
    %v153 = vadd.s32 %v152, 8
    %v154 = vstv %s150
    %v155 = vadd.s32 %v154, %v152
    %v156 = vadd.s32 %v154, %v153
    %s157 = smul.u32 0, 16
    %v158 = vlaneseq
    %v159 = vand.u32 %v158, 127
    %v160 = vstv %s157
    %v161 = vadd.s32 %v160, %v159
    %vm162 = vcmp.ne.s32.totalorder %v155, %v161
    %vm163 = vcmp.ne.s32.totalorder %v156, %v161
    %v164 = vsel %vm162, %v148, 0.0
    %v165 = vsel %vm163, %v149, 0.0
    %166 = vset.pattern.permute.xlu0 1
    %167 = vperm.xlu0 %166, %v48
    %v168 = vpop.permute.xlu0 %167
    %170 = vset.pattern.permute.xlu0 1
    %171 = vperm.xlu0 %170, %v49
    %v172 = vpop.permute.xlu0 %171
    %v174 = vlaneseq
    %v175 = vshrl.u32 %v174, 7
    %v176 = vsub.s32 0, %v175
    %v177 = vrot.slane %v51, %v176
    %vm178 = vcmp.eq.f32.partialorder %v168, %v177
    %vm179 = vcmp.eq.f32.partialorder %v172, %v177
    %vm180 = vmand %vm162, %vm178
    %vm181 = vmand %vm163, %vm179
    %v182 = vsel %vm180, 1, 0
    %v183 = vsel %vm181, 1, 0
    %v184 = vcvt.s32.f32 %v182
    %v185 = vcvt.s32.f32 %v183
    %v186 = vld [vmem:[#allocation2] sm:$0xff]
    %v187 = vld [vmem:[#allocation2 + $0x8] sm:$0xff]
    %vm188 = vcmask 130048
    %v189 = vsel %vm188, %v164, 0.0
    %190 = vadd.xlane.f32.xlu0 %v189
    %v191 = vpop.xlane.xlu0 %190
    %v192 = vsel %vm188, %v165, 0.0
    %193 = vadd.xlane.f32.xlu0 %v192
    %v194 = vpop.xlane.xlu0 %193
    %v195 = vadd.f32 %v186, %v191
    %v196 = vadd.f32 %v187, %v194
    %vm197 = vcmask 7168
    %198 = vst.msk [vmem:[#allocation2] sm:$0xff] %vm197, %v195
    %199 = vst.msk [vmem:[#allocation2 + $0x8] sm:$0xff] %vm197, %v196
    %v200 = vld [vmem:[#allocation3] sm:$0xff]
    %v201 = vld [vmem:[#allocation3 + $0x8] sm:$0xff]
    %v202 = vlaneseq
    %v203 = vshrl.u32 %v202, 7
    %v204 = vsub.s32 0, %v203
    %v205 = vrot.slane %v50, %v204
    %v206 = vmul.f32 %v205, %v164
    %v207 = vmul.f32 %v205, %v165
    %v208 = vsel %vm188, %v206, 0.0
    %209 = vadd.xlane.f32.xlu0 %v208
    %v210 = vpop.xlane.xlu0 %209
    %v211 = vsel %vm188, %v207, 0.0
    %212 = vadd.xlane.f32.xlu0 %v211
    %v213 = vpop.xlane.xlu0 %212
    %v214 = vadd.f32 %v200, %v210
    %v215 = vadd.f32 %v201, %v213
    %216 = vst.msk [vmem:[#allocation3] sm:$0xff] %vm197, %v214
    %217 = vst.msk [vmem:[#allocation3 + $0x8] sm:$0xff] %vm197, %v215
    %v218 = vld [vmem:[#allocation4] sm:$0xff]
    %v219 = vld [vmem:[#allocation4 + $0x8] sm:$0xff]
    %v220 = vmul.f32 %v184, %v164
    %v221 = vmul.f32 %v185, %v165
    %v222 = vsel %vm188, %v220, 0.0
    %223 = vadd.xlane.f32.xlu0 %v222
    %v224 = vpop.xlane.xlu0 %223
    %v225 = vsel %vm188, %v221, 0.0
    %226 = vadd.xlane.f32.xlu0 %v225
    %v227 = vpop.xlane.xlu0 %226
    %v228 = vadd.f32 %v218, %v224
    %v229 = vadd.f32 %v219, %v227
    %230 = vst.msk [vmem:[#allocation4] sm:$0xff] %vm197, %v228
    %231 = vst.msk [vmem:[#allocation4 + $0x8] sm:$0xff] %vm197, %v229
    %v232 = vld [vmem:[#allocation5] sm:$0xff]
    %v233 = vld [vmem:[#allocation5 + $0x8] sm:$0xff]
    %v234 = vsel %vm188, %v184, 0.0
    %235 = vadd.xlane.f32.xlu0 %v234
    %v236 = vpop.xlane.xlu0 %235
    %v237 = vsel %vm188, %v185, 0.0
    %238 = vadd.xlane.f32.xlu0 %v237
    %v239 = vpop.xlane.xlu0 %238
    %v240 = vadd.f32 %v232, %v236
    %v241 = vadd.f32 %v233, %v239
    %242 = vst.msk [vmem:[#allocation5] sm:$0xff] %vm197, %v240
    %243 = vst.msk [vmem:[#allocation5 + $0x8] sm:$0xff] %vm197, %v241
    // Predicated region
    $region26: #{tpu_custom_call.1} parent=1 // pred_check
      %p244 = pneg %p31
    $region27: #{tpu_custom_call.1} parent=1 // pred_check_branch
      %246 = sbr.rel (%p244) target = $region29
    $region28: #{tpu_custom_call.1} parent=1 // pred_region
      %v247 = vld [vmem:[%s2] sm:$0xff]
      %v248 = vld [vmem:[%s2 + $0x8] sm:$0xff]
      %v249 = vsub.f32 1.0, %v247
      %v250 = vsub.f32 1.0, %v248
      %v251 = vld [vmem:[#allocation2] sm:$0xff]
      %v252 = vld [vmem:[#allocation2 + $0x8] sm:$0xff]
      %v253 = vld [vmem:[#allocation3] sm:$0xff]
      %v254 = vld [vmem:[#allocation3 + $0x8] sm:$0xff]
      %v255 = vld [vmem:[#allocation4] sm:$0xff]
      %v256 = vld [vmem:[#allocation4 + $0x8] sm:$0xff]
      %v257 = vld [vmem:[#allocation5] sm:$0xff]
      %v258 = vld [vmem:[#allocation5 + $0x8] sm:$0xff]
      %v259 = vmul.f32 %v247, %v253
      %v260 = vmul.f32 %v248, %v254
      %v261 = vsub.f32 %v251, %v253
      %v262 = vsub.f32 %v252, %v254
      %v263 = vmul.f32 %v249, %v261
      %v264 = vmul.f32 %v250, %v262
      %v265 = vadd.f32 %v259, %v263
      %v266 = vadd.f32 %v260, %v264
      %v267 = vsub.f32 %v265, %v255
      %v268 = vsub.f32 %v266, %v256
      %v269 = vsub.f32 %v255, %v263
      %v270 = vsub.f32 %v256, %v264
      %v271 = vmul.f32 %v247, %v261
      %v272 = vmul.f32 %v248, %v262
      %v273 = vmul.f32 %v249, %v253
      %v274 = vmul.f32 %v250, %v254
      %v275 = vadd.f32 %v271, %v273
      %v276 = vadd.f32 %v272, %v274
      %279 = vrot.lane.b32.xlu0 %v257, 5
      %v280 = vpop.permute.xlu0 %279
      %281 = vrot.lane.b32.xlu0 %v258, 5
      %v282 = vpop.permute.xlu0 %281
      %v285 = vsub.f32 %v247, %v280
      %v286 = vsub.f32 %v248, %v282
      %289 = vrot.lane.b32.xlu0 %v247, 125
      %v290 = vpop.permute.xlu0 %289
      %291 = vrot.lane.b32.xlu0 %v248, 125
      %v292 = vpop.permute.xlu0 %291
      %v295 = vsub.f32 %v257, %v290
      %v296 = vsub.f32 %v258, %v292
      %v297 = vmul.f32 %v247, 10.0
      %v298 = vmul.f32 %v248, 10.0
      %301 = vrot.lane.b32.xlu0 %v297, 125
      %v302 = vpop.permute.xlu0 %301
      %303 = vrot.lane.b32.xlu0 %v298, 125
      %v304 = vpop.permute.xlu0 %303
      %v307 = vsub.f32 %v263, %v302
      %v308 = vsub.f32 %v264, %v304
      %v309 = vmax.f32 %v307, 0.0
      %v310 = vmax.f32 %v308, 0.0
      %v311 = vmax.f32 %v247, 1.0
      %v312 = vmax.f32 %v248, 1.0
      %315 = vrot.lane.b32.xlu0 %v311, 125
      %v316 = vpop.permute.xlu0 %315
      %317 = vrot.lane.b32.xlu0 %v312, 125
      %v318 = vpop.permute.xlu0 %317
      %v321 = vrcp.pop %v316
      %v322 = vmul.f32 %v309, %v321
      %v323 = vrcp.pop %v318
      %v324 = vmul.f32 %v310, %v323
      %v325 = vmul.f32 %v285, 10.0
      %v326 = vmul.f32 %v286, 10.0
      %329 = vrot.lane.b32.xlu0 %v325, 123
      %v330 = vpop.permute.xlu0 %329
      %331 = vrot.lane.b32.xlu0 %v326, 123
      %v332 = vpop.permute.xlu0 %331
      %v335 = vsub.f32 %v267, %v330
      %v336 = vsub.f32 %v268, %v332
      %v337 = vmax.f32 %v335, 0.0
      %v338 = vmax.f32 %v336, 0.0
      %v339 = vmax.f32 %v285, 1.0
      %v340 = vmax.f32 %v286, 1.0
      %343 = vrot.lane.b32.xlu0 %v339, 123
      %v344 = vpop.permute.xlu0 %343
      %345 = vrot.lane.b32.xlu0 %v340, 123
      %v346 = vpop.permute.xlu0 %345
      %v349 = vrcp.pop %v344
      %v350 = vmul.f32 %v337, %v349
      %v351 = vrcp.pop %v346
      %v352 = vmul.f32 %v338, %v351
      %v353 = vadd.f32 %v322, %v350
      %v354 = vadd.f32 %v324, %v352
      %v355 = vmax.f32 %v295, 1.0
      %v356 = vmax.f32 %v296, 1.0
      %v357 = vrcp.pop %v355
      %v358 = vmul.f32 %v269, %v357
      %v359 = vrcp.pop %v356
      %v360 = vmul.f32 %v270, %v359
      %v361 = vadd.f32 %v353, %v358
      %v362 = vadd.f32 %v354, %v360
      %v363 = vmul.f32 %v247, 20.0
      %v364 = vmul.f32 %v248, 20.0
      %367 = vrot.lane.b32.xlu0 %v275, 4
      %v368 = vpop.permute.xlu0 %367
      %369 = vrot.lane.b32.xlu0 %v276, 4
      %v370 = vpop.permute.xlu0 %369
      %v373 = vsub.f32 %v363, %v368
      %v374 = vsub.f32 %v364, %v370
      %v375 = vmax.f32 %v373, 0.0
      %v376 = vmax.f32 %v374, 0.0
      %v377 = vrcp.pop %v311
      %v378 = vmul.f32 %v375, %v377
      %v379 = vrcp.pop %v312
      %v380 = vmul.f32 %v376, %v379
      %383 = vrot.lane.b32.xlu0 %v378, 124
      %v384 = vpop.permute.xlu0 %383
      %385 = vrot.lane.b32.xlu0 %v380, 124
      %v386 = vpop.permute.xlu0 %385
      %v389 = vadd.f32 %v361, %v384
      %v390 = vadd.f32 %v362, %v386
      %391 = vst.msk [vmem:[%s4] sm:$0xff] %vm197, %v389
      %392 = vst.msk [vmem:[%s4 + $0x8] sm:$0xff] %vm197, %v390
    $region29: #{tpu_custom_call.1} parent=1 // pred_fallthru
      _
    // Predicated region
    $region30: #{tpu_custom_call.1} parent=1 // pred_check
      _
    $region31: #{tpu_custom_call.1} parent=1 // pred_check_branch
      %394 = sbr.rel (0) target = $region33
    $region32: #{tpu_custom_call.1} parent=1 // pred_region
      _
    $region33: #{tpu_custom_call.1} parent=1 // pred_fallthru
      _
    // Predicated region
    $region34: #{tpu_custom_call.1} parent=1 // pred_check
      _
    $region35: #{tpu_custom_call.1} parent=1 // pred_check_branch
      %396 = sbr.rel (0) target = $region37
    $region36: #{tpu_custom_call.1} parent=1 // pred_region
      _
    $region37: #{tpu_custom_call.1} parent=1 // pred_fallthru
      _
    %397 = vsyncpa [#allocation7], 1

</llo_original>
